<compile_context>
chip_gen: v7x
topology: tpu7x:2x2x1
jax: 0.10.0
libtpu: 0.0.40
codegen_flags: <defaults>
</compile_context>

<pallas_src>
import jax
import jax.numpy as jnp
from jax.experimental import pallas as pl
from jax.experimental.pallas import tpu as pltpu

_LANE = 128
_SUBLANE = 8
_TILE_BYTES_TARGET = 4 * 1024 * 1024    # per big tile; in+out x 2 bufs ~= 16 MiB
_VMEM_LIMIT_BYTES = 40 * 1024 * 1024    # < v7x 64 MiB physical, << v5e/v6e 128 MiB
_XLA_FAST_PATH_BYTES = 2 * 1024 * 1024  # below this, fused XLA beats a launch


def _ia3_mul_kernel(w_ref, x_ref, o_ref):
    # VPU broadcast multiply:
    #   clk path: (TB, TF, TL) * (1, TF, 1)  -- per-sublane splat
    #   clv path: (TB, TL, TF) * (1, 1, TF)  -- per-lane scale
    o_ref[...] = (x_ref[...] * w_ref[...]).astype(o_ref.dtype)


def _plan_tiles(b, rows, lanes, itemsize, target_bytes):
    """Choose a (TB, TR, TL) block for an array of shape (b, rows, lanes).

    Per the (8,128) rule a block dim on the last two axes must be a multiple
    of 8/128 OR equal the full array dim. Policy:
      * lane (last) dim: full dim when even 8 rows of it fit the byte budget
        (fully contiguous DMA rows), otherwise a 128-multiple chunk;
      * sublane (middle) dim: fill the remaining budget in multiples of 8;
      * batch (leading) dim: block several batches only when a whole
        (rows, lanes) slab underfills the budget, but keep >= 2 grid steps so
        the parallel grid can use both TensorCores on v7x.
    With a pl.cdiv grid only edge tiles are masked; interior tiles stay
    unmasked and lane-dense.
    """
    # Lane (last) dim.
    if lanes <= _LANE or lanes * _SUBLANE * itemsize <= target_bytes:
        t_lane = lanes                                   # full dim
    else:
        t_lane = max(_LANE,
                     (target_bytes // (_SUBLANE * itemsize)) // _LANE * _LANE)
        t_lane = min(t_lane, (lanes // _LANE) * _LANE)   # 128-multiple chunk

    # Sublane (middle) dim.
    row_budget = max(_SUBLANE, target_bytes // (t_lane * itemsize))
    t_rows = rows if row_budget >= rows else (row_budget // _SUBLANE) * _SUBLANE

    # Batch (leading) dim.
    t_b = 1
    if t_rows == rows and t_lane == lanes:
        slab_bytes = max(rows * lanes * itemsize, 1)
        t_b = max(1, min(b, target_bytes // slab_bytes))
        if t_b >= b and b > 1:
            # Whole tensor would be one grid step: split the batch so the
            # grid has >= 2 parallel iterations (megacore on v7x).
            t_b = -(-b // 2)
    return t_b, t_rows, t_lane


def _compiler_params():
    return pltpu.CompilerParams(
        dimension_semantics=("parallel", "parallel", "parallel"),
        vmem_limit_bytes=_VMEM_LIMIT_BYTES,
    )


def _scale_rows(clk, weight_k, out_dtype, tile_bytes):
    """out[b, f, l] = weight_k[0, f, 0] * clk[b, f, l]."""
    B, F, L = clk.shape
    itemsize = max(clk.dtype.itemsize, weight_k.dtype.itemsize, out_dtype.itemsize)
    TB, TF, TL = _plan_tiles(B, F, L, itemsize, tile_bytes)
    grid = (pl.cdiv(B, TB), pl.cdiv(F, TF), pl.cdiv(L, TL))
    return pl.pallas_call(
        _ia3_mul_kernel,
        out_shape=jax.ShapeDtypeStruct((B, F, L), out_dtype),
        grid=grid,
        in_specs=[
            pl.BlockSpec((1, TF, 1), lambda b, f, l: (0, f, 0)),     # weight_k slice
            pl.BlockSpec((TB, TF, TL), lambda b, f, l: (b, f, l)),   # clk tile
        ],
        out_specs=pl.BlockSpec((TB, TF, TL), lambda b, f, l: (b, f, l)),
        compiler_params=_compiler_params(),
    )(weight_k, clk)


def _scale_lanes(clv, weight_v, out_dtype, tile_bytes):
    """out[b, l, f] = weight_v[0, 0, f] * clv[b, l, f]."""
    B, L, F = clv.shape
    itemsize = max(clv.dtype.itemsize, weight_v.dtype.itemsize, out_dtype.itemsize)
    TB, TL, TF = _plan_tiles(B, L, F, itemsize, tile_bytes)
    grid = (pl.cdiv(B, TB), pl.cdiv(L, TL), pl.cdiv(F, TF))
    return pl.pallas_call(
        _ia3_mul_kernel,
        out_shape=jax.ShapeDtypeStruct((B, L, F), out_dtype),
        grid=grid,
        in_specs=[
            pl.BlockSpec((1, 1, TF), lambda b, l, f: (0, 0, f)),     # weight_v slice
            pl.BlockSpec((TB, TL, TF), lambda b, l, f: (b, l, f)),   # clv tile
        ],
        out_specs=pl.BlockSpec((TB, TL, TF), lambda b, l, f: (b, l, f)),
        compiler_params=_compiler_params(),
    )(weight_v, clv)


def trans_ia3_forward(clk, clv, weight_k, weight_v, *,
                      force_pallas=False, tile_bytes=_TILE_BYTES_TARGET):
    """Pallas implementation of trans_ia3.forward.

    clk: (B, F, L), clv: (B, L, F), weight_k: (1, F, 1), weight_v: (1, 1, F).
    Returns (weight_k * clk, weight_v * clv).
    """
    B, F, L = clk.shape
    assert clv.shape == (B, L, F)
    assert weight_k.shape == (1, F, 1)
    assert weight_v.shape == (1, 1, F)

    # Match PyTorch's "weight * activation" type promotion.
    out_k_dtype = jnp.result_type(clk.dtype, weight_k.dtype)
    out_v_dtype = jnp.result_type(clv.dtype, weight_v.dtype)

    total_bytes = (clk.size * clk.dtype.itemsize
                   + clv.size * clv.dtype.itemsize)
    if not force_pallas and total_bytes < _XLA_FAST_PATH_BYTES:
        # KB-scale inputs: pallas_call launch + grid machinery is pure
        # overhead; XLA's fused elementwise multiply wins.
        return ((weight_k * clk).astype(out_k_dtype),
                (weight_v * clv).astype(out_v_dtype))

    out_k = _scale_rows(clk, weight_k, out_k_dtype, tile_bytes)
    out_v = _scale_lanes(clv, weight_v, out_v_dtype, tile_bytes)
    return out_k, out_v


class TransIA3:
    """Mirror of the PyTorch module; params initialized to ones (as in __init__)."""

    def __init__(self, feat_dim, dtype=jnp.float32):
        self.weight_k = jnp.ones((1, feat_dim, 1), dtype=dtype)
        self.weight_v = jnp.ones((1, 1, feat_dim), dtype=dtype)

    def __call__(self, clk, clv, *, force_pallas=False):
        return trans_ia3_forward(clk, clv, self.weight_k, self.weight_v,
                                 force_pallas=force_pallas)


if __name__ == "__main__":
    key = jax.random.PRNGKey(0)
    k1, k2, k3, k4, k5, k6 = jax.random.split(key, 6)

    # --- Case 1: module's small spec shapes; Pallas path forced -------------
    feat_dim, batch, seq = 32, 2, 8
    clk = jax.random.normal(k1, (batch, feat_dim, seq), dtype=jnp.float32)
    clv = jax.random.normal(k2, (batch, seq, feat_dim), dtype=jnp.float32)

    module = TransIA3(feat_dim)
    # Perturb the (deterministically initialized) weights so the broadcast
    # multiply is actually exercised, while staying fully in-script.
    module.weight_k = module.weight_k + 0.1 * jax.random.normal(
        k3, module.weight_k.shape, dtype=jnp.float32)
    module.weight_v = module.weight_v + 0.1 * jax.random.normal(
        k4, module.weight_v.shape, dtype=jnp.float32)

    out_k, out_v = module(clk, clv, force_pallas=True)
    jax.block_until_ready((out_k, out_v))

    ref_k = module.weight_k * clk
    ref_v = module.weight_v * clv
    assert out_k.shape == clk.shape and out_v.shape == clv.shape
    assert jnp.allclose(out_k, ref_k, atol=1e-6, rtol=1e-6)
    assert jnp.allclose(out_v, ref_v, atol=1e-6, rtol=1e-6)

    # --- Case 2: non-128-multiple dims + tiny tile budget to exercise the
    #     cdiv grid, masked edge tiles, and batch blocking --------------------
    B2, F2, L2 = 3, 200, 176
    clk2 = jax.random.normal(k5, (B2, F2, L2), dtype=jnp.float32)
    clv2 = jax.random.normal(k6, (B2, L2, F2), dtype=jnp.float32)
    wk2 = 1.0 + 0.05 * jax.random.normal(k3, (1, F2, 1), dtype=jnp.float32)
    wv2 = 1.0 + 0.05 * jax.random.normal(k4, (1, 1, F2), dtype=jnp.float32)

    out_k2, out_v2 = trans_ia3_forward(
        clk2, clv2, wk2, wv2, force_pallas=True, tile_bytes=64 * 1024)
    jax.block_until_ready((out_k2, out_v2))
    assert jnp.allclose(out_k2, wk2 * clk2, atol=1e-6, rtol=1e-6)
    assert jnp.allclose(out_v2, wv2 * clv2, atol=1e-6, rtol=1e-6)

    print("KERNEL_OK")
</pallas_src>

<mosaic_0001>
module attributes {stable_mosaic.version = 11 : i64} {
  func.func @_ia3_mul_kernel(%arg0: i32, %arg1: i32, %arg2: i32, %arg3: memref<1x32x1xf32, #tpu.memory_space<vmem>>, %arg4: memref<1x32x8xf32, #tpu.memory_space<vmem>>, %arg5: memref<1x32x8xf32, #tpu.memory_space<vmem>>) attributes {dimension_semantics = [#tpu.dimension_semantics<parallel>, #tpu.dimension_semantics<parallel>, #tpu.dimension_semantics<parallel>], iteration_bounds = array<i64: 2, 1, 1>, scalar_prefetch = 0 : i64, scratch_operands = 0 : i64, tpu.core_type = #tpu.core_type<tc>, window_params = [{transform_indices = @transform_0, window_bounds = array<i64: 1, 32, 1>}, {transform_indices = @transform_1, window_bounds = array<i64: 1, 32, 8>}, {transform_indices = @transform_2, window_bounds = array<i64: 1, 32, 8>}]} {
    %c0 = arith.constant 0 : index
    %c0_0 = arith.constant 0 : index
    %c0_1 = arith.constant 0 : index
    %0 = vector.load %arg4[%c0, %c0_0, %c0_1] : memref<1x32x8xf32, #tpu.memory_space<vmem>>, vector<1x32x8xf32>
    %c0_2 = arith.constant 0 : index
    %c0_3 = arith.constant 0 : index
    %c0_4 = arith.constant 0 : index
    %1 = vector.load %arg3[%c0_2, %c0_3, %c0_4] : memref<1x32x1xf32, #tpu.memory_space<vmem>>, vector<1x32x1xf32>
    %2 = vector.broadcast %1 : vector<1x32x1xf32> to vector<1x32x8xf32>
    %3 = arith.mulf %0, %2 : vector<1x32x8xf32>
    %c0_5 = arith.constant 0 : index
    %c0_6 = arith.constant 0 : index
    %c0_7 = arith.constant 0 : index
    %4 = vector.load %arg5[%c0_5, %c0_6, %c0_7] : memref<1x32x8xf32, #tpu.memory_space<vmem>>, vector<1x32x8xf32>
    tpu.vector_store %arg5[%c0_5, %c0_6, %c0_7], %3 {strides = array<i32>} : memref<1x32x8xf32, #tpu.memory_space<vmem>>, vector<1x32x8xf32>,
    return
  }
  func.func @transform_0(%arg0: i32, %arg1: i32, %arg2: i32) -> (i32, i32, i32) {
    %c0_i32 = arith.constant 0 : i32
    %c0_i32_0 = arith.constant 0 : i32
    %c0_i32_1 = arith.constant 0 : i32
    return %c0_i32, %arg1, %c0_i32_0 : i32, i32, i32
  }
  func.func @transform_1(%arg0: i32, %arg1: i32, %arg2: i32) -> (i32, i32, i32) {
    %c0_i32 = arith.constant 0 : i32
    return %arg0, %arg1, %arg2 : i32, i32, i32
  }
  func.func @transform_2(%arg0: i32, %arg1: i32, %arg2: i32) -> (i32, i32, i32) {
    %c0_i32 = arith.constant 0 : i32
    return %arg0, %arg1, %arg2 : i32, i32, i32
  }
}

</mosaic_0001>

<llo_original>
// kernel: tpu_custom_call.1
$region0: #{tpu_custom_call.1}
  #allocation0 [shape = 'u32[]', space=smem, size = 0x4, offset = 0x4, fixed_abs, tag = 'smem constant byte address 0x4 - core index']
  #allocation1 [shape = 'u32[144,128]{1,0:T(1,128)}', space=vmem, size = 0x12000, scoped, tag = 'internal scratch']
  %s0 = inlined_call_operand.vmem [shape: f32[1,32,1], index: 0, kind: input, shape index: {}]
  %s1 = inlined_call_operand.vmem [shape: f32[2,32,8], index: 1, kind: input, shape index: {}]
  %s2 = inlined_call_operand.vmem [shape: f32[2,32,8], index: 2, kind: output, shape index: {}]
  %s3 = sld [smem:[#allocation0]]
  $region41: #{tpu_custom_call.1} parent=0
    _
  %s5 = ssub.s32 1, %s3
  %s6 = scalar_select 0, %s5, %s3
  loop: start=0, step=1, limit=4
  $region2: #{tpu_custom_call.1} parent=0 // loop_pre_header
    _
  $region3: #{tpu_custom_call.1} parent=0 // loop_header
    %s8 = sphi 0, %s12
    %p9 = scmp.ge.s32.totalorder %s8, 4
    %s15 = sphi 0, %s34
    %s16 = sphi 0, %s30
    %s17 = sphi 0, %s26
    %s18 = sphi 0, %s15
    %s19 = sphi 0, %s16
    %s20 = sphi 0, %s17
    %s21 = sphi 0, %s18
    %s22 = sphi 0, %s19
    %s23 = sphi 0, %s20
    %s37 = sphi 0, %s39
    %s40 = sphi 0, %s37
    %s41 = sphi 0, %s40
    %s57 = sphi 0, %s41
    %s67 = sphi 0, %s69
    %s70 = sphi 0, %s67
    %s71 = sphi 0, %s70
    %s87 = sphi 0, %s71
    %s97 = sphi 0, %s99
    %s100 = sphi 0, %s97
    %s101 = sphi 0, %s100
    %s117 = sphi 0, %s101
  $region4: #{tpu_custom_call.1} parent=0 // loop_header_branch
    %11 = sbr.rel (%p9) target = $region8
  $region5: #{tpu_custom_call.1} parent=0 // loop_body
    %s13 = ssub.s32 %s8, 1
    %s14 = ssub.s32 %s8, 2
    %s24 = sadd.s32 1, %s17
    %p25 = scmp.ge.s32.totalorder %s24, 1
    %s26 = scalar_select %p25, 0, %s24
    %s27 = sadd.s32 1, %s16
    %s28 = scalar_select %p25, %s27, %s16
    %p29 = scmp.ge.s32.totalorder %s28, 1
    %s30 = scalar_select %p29, 0, %s28
    %s31 = sadd.s32 1, %s15
    %s32 = scalar_select %p29, %s31, %s15
    %p33 = scmp.ge.s32.totalorder %s32, 2
    %s34 = scalar_select %p33, 0, %s32
    %s35 = ssub.s32 %s16, %s30
    %p36 = scmp.eq.s32.totalorder %s35, 0
    %s38 = sadd.s32 %s37, 1
    %s39 = scalar_select %p36, %s37, %s38
    %p42 = pneg %p36
    %p43 = scmp.eq.s32.totalorder %s8, 1
    %p44 = por %p42, %p43
    %p45 = scmp.ne.s32.totalorder %s37, %s40
    %p46 = scmp.eq.s32.totalorder %s8, 0
    %p47 = por %p45, %p46
    %p48 = scmp.ne.s32.totalorder %s37, %s40
    %p49 = scmp.eq.s32.totalorder %s13, 1
    %p50 = por %p48, %p49
    %p51 = scmp.ne.s32.totalorder %s40, %s41
    %p52 = scmp.eq.s32.totalorder %s13, 0
    %p53 = por %p51, %p52
    %p54 = scmp.ne.s32.totalorder %s40, %s41
    %p55 = scmp.eq.s32.totalorder %s14, 1
    %p56 = por %p54, %p55
    %p58 = scmp.ne.s32.totalorder %s41, %s57
    %p59 = scmp.eq.s32.totalorder %s14, 0
    %p60 = por %p58, %p59
    %s61 = ssub.s32 %s15, %s34
    %s62 = ssub.s32 %s16, %s30
    %s63 = sor.u32 %s61, %s62
    %s64 = ssub.s32 %s17, %s26
    %s65 = sor.u32 %s63, %s64
    %p66 = scmp.eq.s32.totalorder %s65, 0
    %s68 = sadd.s32 %s67, 1
    %s69 = scalar_select %p66, %s67, %s68
    %p72 = pneg %p66
    %p73 = scmp.eq.s32.totalorder %s8, 1
    %p74 = por %p72, %p73
    %p75 = scmp.ne.s32.totalorder %s67, %s70
    %p76 = scmp.eq.s32.totalorder %s8, 0
    %p77 = por %p75, %p76
    %p78 = scmp.ne.s32.totalorder %s67, %s70
    %p79 = scmp.eq.s32.totalorder %s13, 1
    %p80 = por %p78, %p79
    %p81 = scmp.ne.s32.totalorder %s70, %s71
    %p82 = scmp.eq.s32.totalorder %s13, 0
    %p83 = por %p81, %p82
    %p84 = scmp.ne.s32.totalorder %s70, %s71
    %p85 = scmp.eq.s32.totalorder %s14, 1
    %p86 = por %p84, %p85
    %p88 = scmp.ne.s32.totalorder %s71, %s87
    %p89 = scmp.eq.s32.totalorder %s14, 0
    %p90 = por %p88, %p89
    %s91 = ssub.s32 %s15, %s34
    %s92 = ssub.s32 %s16, %s30
    %s93 = sor.u32 %s91, %s92
    %s94 = ssub.s32 %s17, %s26
    %s95 = sor.u32 %s93, %s94
    %p96 = scmp.eq.s32.totalorder %s95, 0
    %s98 = sadd.s32 %s97, 1
    %s99 = scalar_select %p96, %s97, %s98
    %p102 = pneg %p96
    %p103 = scmp.eq.s32.totalorder %s8, 1
    %p104 = por %p102, %p103
    %p105 = scmp.ne.s32.totalorder %s97, %s100
    %p106 = scmp.eq.s32.totalorder %s8, 0
    %p107 = por %p105, %p106
    %p108 = scmp.ne.s32.totalorder %s97, %s100
    %p109 = scmp.eq.s32.totalorder %s13, 1
    %p110 = por %p108, %p109
    %p111 = scmp.ne.s32.totalorder %s100, %s101
    %p112 = scmp.eq.s32.totalorder %s13, 0
    %p113 = por %p111, %p112
    %p114 = scmp.ne.s32.totalorder %s100, %s101
    %p115 = scmp.eq.s32.totalorder %s14, 1
    %p116 = por %p114, %p115
    %p118 = scmp.ne.s32.totalorder %s101, %s117
    %p119 = scmp.eq.s32.totalorder %s14, 0
    %p120 = por %p118, %p119
    %p121 = scmp.le.s32.totalorder 1, %s8
    %p122 = scmp.lt.s32.totalorder %s8, 3
    %p123 = pnand %p121, %p122
    %p124 = pneg %p123
    // Predicated region
    $region9: #{tpu_custom_call.1} parent=5 // pred_check
      _
    $region10: #{tpu_custom_call.1} parent=5 // pred_check_branch
      %126 = sbr.rel (%p123) target = $region12
    $region11: #{tpu_custom_call.1} parent=5 // pred_region
      %s127 = ssub.s32 %s8, 1
      // Predicated region
      $region13: #{tpu_custom_call.1} parent=11 // pred_check
        %p128 = pneg %p53
      $region14: #{tpu_custom_call.1} parent=11 // pred_check_branch
        %130 = sbr.rel (%p128) target = $region16
      $region15: #{tpu_custom_call.1} parent=11 // pred_region
        %s131 = smul.u32 4, %s19
        %p132 = scmp.lt.s32.totalorder %s131, 3
        %s133 = scalar_select %p132, %s131, 3
        %s134 = smul.addr %s133, 8
        %s135 = scalar_lea.vmem %s0, %s134
        %s136 = smul.u32 4, %s19
      $region16: #{tpu_custom_call.1} parent=11 // pred_fallthru
        _
    $region12: #{tpu_custom_call.1} parent=5 // pred_fallthru
      _
    %p137 = scmp.lt.s32.totalorder %s8, 2
    // Predicated region
    $region17: #{tpu_custom_call.1} parent=5 // pred_check
      %p138 = pneg %p137
    $region18: #{tpu_custom_call.1} parent=5 // pred_check_branch
      %140 = sbr.rel (%p138) target = $region20
    $region19: #{tpu_custom_call.1} parent=5 // pred_region
      // Predicated region
      $region21: #{tpu_custom_call.1} parent=19 // pred_check
        %p141 = pneg %p77
      $region22: #{tpu_custom_call.1} parent=19 // pred_check_branch
        %143 = sbr.rel (%p141) target = $region24
      $region23: #{tpu_custom_call.1} parent=19 // pred_region
        %s144 = smul.u32 4, %s16
        %p145 = scmp.lt.s32.totalorder %s15, 1
        %s146 = scalar_select %p145, %s15, 1
        %p147 = scmp.lt.s32.totalorder %s144, 3
        %s148 = scalar_select %p147, %s144, 3
        %p149 = scmp.lt.s32.totalorder %s17, 0
        %s150 = scalar_select %p149, %s17, 0
        %s151 = sadd.s32 %s150, %s148
        %s152 = smul.addr %s146, 4
        %s153 = sadd.s32 %s151, %s152
        %s154 = smul.addr %s153, 8
        %s155 = scalar_lea.vmem %s1, %s154
        %s156 = smul.u32 4, %s16
      $region24: #{tpu_custom_call.1} parent=19 // pred_fallthru
        _
    $region20: #{tpu_custom_call.1} parent=5 // pred_fallthru
      _
    %p157 = scmp.le.s32.totalorder 1, %s8
    %p158 = scmp.lt.s32.totalorder %s8, 3
    %p159 = pnand %p157, %p158
    %p160 = pneg %p159
    // Predicated region
    $region25: #{tpu_custom_call.1} parent=5 // pred_check
      _
    $region26: #{tpu_custom_call.1} parent=5 // pred_check_branch
      %162 = sbr.rel (%p159) target = $region28
    $region27: #{tpu_custom_call.1} parent=5 // pred_region
      %s163 = ssub.s32 %s8, 1
      %s164 = smul.u32 4, %s19
      %p165 = scmp.lt.s32.totalorder %s164, 3
      %s166 = scalar_select %p165, %s164, 3
      %s167 = smul.addr %s166, 8
      %s168 = scalar_lea.vmem %s0, %s167
      %p169 = pneg %p53
      %p170 = pneg %p50
      %s171 = smul.u32 4, %s19
      %p172 = scmp.lt.s32.totalorder %s18, 1
      %s173 = scalar_select %p172, %s18, 1
      %p174 = scmp.lt.s32.totalorder %s171, 3
      %s175 = scalar_select %p174, %s171, 3
      %p176 = scmp.lt.s32.totalorder %s20, 0
      %s177 = scalar_select %p176, %s20, 0
      %s178 = sadd.s32 %s177, %s175
      %s179 = smul.addr %s173, 4
      %s180 = sadd.s32 %s178, %s179
      %s181 = smul.addr %s180, 8
      %s182 = scalar_lea.vmem %s1, %s181
      %p183 = pneg %p83
      %p184 = pneg %p80
      %p185 = pneg %p113
      %p186 = pneg %p110
      %s187 = smul.u32 4, %s19
      %p188 = scmp.lt.s32.totalorder %s18, 1
      %s189 = scalar_select %p188, %s18, 1
      %p190 = scmp.lt.s32.totalorder %s187, 3
      %s191 = scalar_select %p190, %s187, 3
      %p192 = scmp.lt.s32.totalorder %s20, 0
      %s193 = scalar_select %p192, %s20, 0
      %s194 = sadd.s32 %s193, %s191
      %s195 = smul.addr %s189, 4
      %s196 = sadd.s32 %s194, %s195
      %s197 = smul.addr %s196, 8
      %s198 = scalar_lea.vmem %s2, %s197
      %s199 = smul.u32 4, %s19
      %p200 = scmp.lt.s32.totalorder %s199, 3
      %s201 = scalar_select %p200, %s199, 3
      %s202 = smul.addr %s201, 8
      %s203 = scalar_lea.vmem %s0, %s202
      %s204 = smul.u32 4, %s19
      %s205 = smul.u32 4, %s19
      %p206 = scmp.lt.s32.totalorder %s18, 1
      %s207 = scalar_select %p206, %s18, 1
      %p208 = scmp.lt.s32.totalorder %s205, 3
      %s209 = scalar_select %p208, %s205, 3
      %p210 = scmp.lt.s32.totalorder %s20, 0
      %s211 = scalar_select %p210, %s20, 0
      %s212 = sadd.s32 %s211, %s209
      %s213 = smul.addr %s207, 4
      %s214 = sadd.s32 %s212, %s213
      %s215 = smul.addr %s214, 8
      %s216 = scalar_lea.vmem %s1, %s215
      %s217 = smul.u32 4, %s19
      %s218 = smul.u32 4, %s19
      %p219 = scmp.lt.s32.totalorder %s18, 1
      %s220 = scalar_select %p219, %s18, 1
      %p221 = scmp.lt.s32.totalorder %s218, 3
      %s222 = scalar_select %p221, %s218, 3
      %p223 = scmp.lt.s32.totalorder %s20, 0
      %s224 = scalar_select %p223, %s20, 0
      %s225 = sadd.s32 %s224, %s222
      %s226 = smul.addr %s220, 4
      %s227 = sadd.s32 %s225, %s226
      %s228 = smul.addr %s227, 8
      %s229 = scalar_lea.vmem %s2, %s228
      %s230 = smul.u32 4, %s19
      %v231 = vld [vmem:[%s216] sm:$0xff]
      %v232 = vld [vmem:[%s216 + $0x8] sm:$0xff]
      %v233 = vld [vmem:[%s216 + $0x10] sm:$0xff]
      %v234 = vld [vmem:[%s216 + $0x18] sm:$0xff]
      %v235 = vld [vmem:[%s203] sm:$0xff]
      %v236 = vld [vmem:[%s203 + $0x8] sm:$0xff]
      %v237 = vld [vmem:[%s203 + $0x10] sm:$0xff]
      %v238 = vld [vmem:[%s203 + $0x18] sm:$0xff]
      %240 = vset.pattern.permute.xlu0 0
      %241 = vperm.xlu0 %240, %v235
      %v242 = vpop.permute.xlu0 %241
      %245 = vset.pattern.permute.xlu0 0
      %246 = vperm.xlu0 %245, %v236
      %v247 = vpop.permute.xlu0 %246
      %250 = vset.pattern.permute.xlu0 0
      %251 = vperm.xlu0 %250, %v237
      %v252 = vpop.permute.xlu0 %251
      %255 = vset.pattern.permute.xlu0 0
      %256 = vperm.xlu0 %255, %v238
      %v257 = vpop.permute.xlu0 %256
      %v259 = vmul.f32 %v231, %v242
      %v260 = vmul.f32 %v232, %v247
      %v261 = vmul.f32 %v233, %v252
      %v262 = vmul.f32 %v234, %v257
      %vm263 = vcmask 64512
      %264 = vst.msk [vmem:[%s229] sm:$0xff] %vm263, %v259
      %265 = vst.msk [vmem:[%s229 + $0x8] sm:$0xff] %vm263, %v260
      %266 = vst.msk [vmem:[%s229 + $0x10] sm:$0xff] %vm263, %v261
      %267 = vst.msk [vmem:[%s229 + $0x18] sm:$0xff] %vm263, %v262
      %s268 = smul.u32 4, %s19
      %p269 = scmp.lt.s32.totalorder %s18, 1
      %s270 = scalar_select %p269, %s18, 1
      %p271 = scmp.lt.s32.totalorder %s268, 3
      %s272 = scalar_select %p271, %s268, 3
      %p273 = scmp.lt.s32.totalorder %s20, 0
      %s274 = scalar_select %p273, %s20, 0
      %s275 = sadd.s32 %s274, %s272
      %s276 = smul.addr %s270, 4
      %s277 = sadd.s32 %s275, %s276
      %s278 = smul.addr %s277, 8
      %s279 = scalar_lea.vmem %s2, %s278
      // Predicated region
      $region29: #{tpu_custom_call.1} parent=27 // pred_check
        %p280 = pneg %p110
      $region30: #{tpu_custom_call.1} parent=27 // pred_check_branch
        %282 = sbr.rel (%p280) target = $region32
      $region31: #{tpu_custom_call.1} parent=27 // pred_region
        %s283 = smul.u32 4, %s19
      $region32: #{tpu_custom_call.1} parent=27 // pred_fallthru
        _
    $region28: #{tpu_custom_call.1} parent=5 // pred_fallthru
      _
    %p284 = scmp.le.s32.totalorder 2, %s8
    // Predicated region
    $region33: #{tpu_custom_call.1} parent=5 // pred_check
      %p285 = pneg %p284
    $region34: #{tpu_custom_call.1} parent=5 // pred_check_branch
      %287 = sbr.rel (%p285) target = $region36
    $region35: #{tpu_custom_call.1} parent=5 // pred_region
      %s288 = ssub.s32 %s8, 2
      // Predicated region
      $region37: #{tpu_custom_call.1} parent=35 // pred_check
        %p289 = pneg %p116
      $region38: #{tpu_custom_call.1} parent=35 // pred_check_branch
        %291 = sbr.rel (%p289) target = $region40
      $region39: #{tpu_custom_call.1} parent=35 // pred_region
        %s292 = smul.u32 4, %s22
        %p293 = scmp.lt.s32.totalorder %s21, 1
        %s294 = scalar_select %p293, %s21, 1
        %p295 = scmp.lt.s32.totalorder %s292, 3
        %s296 = scalar_select %p295, %s292, 3
        %p297 = scmp.lt.s32.totalorder %s23, 0
        %s298 = scalar_select %p297, %s23, 0
        %s299 = sadd.s32 %s298, %s296
        %s300 = smul.addr %s294, 4
        %s301 = sadd.s32 %s299, %s300
        %s302 = smul.addr %s301, 8
        %s303 = scalar_lea.vmem %s2, %s302
      $region40: #{tpu_custom_call.1} parent=35 // pred_fallthru
        _
    $region36: #{tpu_custom_call.1} parent=5 // pred_fallthru
      _
  $region6: #{tpu_custom_call.1} parent=0 // loop_footer
    %s12 = sadd.s32 1, %s8
  $region7: #{tpu_custom_call.1} parent=0 // loop_footer_branch
    %7 = sbr.rel target = $region3
  $region8: #{tpu_custom_call.1} parent=0 // loop_exit
    _

</llo_original>
